<compile_context>
chip_gen: v7x
topology: tpu7x:2x2x1
jax: 0.10.0
libtpu: 0.0.40
codegen_flags: <defaults>
</compile_context>

<pallas_src>
import functools

import jax
import jax.numpy as jnp
from jax import lax
from jax.experimental import pallas as pl
from jax.experimental.pallas import tpu as pltpu


def _round_up(x, m):
    return ((x + m - 1) // m) * m


# ---------------------------------------------------------------------------
# Path 1: table resident in VMEM (small vocab).
# Gather + padding mask fused into a single one-hot matmul on the MXU:
#   out = onehot(tok) @ table, with all-zero rows for padding / OOB tokens.
# ---------------------------------------------------------------------------
def _embed_vmem_kernel(padding_idx, tok_ref, table_ref, out_ref):
    tok = tok_ref[...]                                    # (T, 1) int32
    T = tok.shape[0]
    V = table_ref.shape[0]
    vocab_iota = lax.broadcasted_iota(jnp.int32, (T, V), 1)
    onehot = jnp.logical_and(vocab_iota == tok, tok != padding_idx)
    onehot = onehot.astype(table_ref.dtype)               # exact 0/1 rows
    out_ref[...] = jnp.dot(
        onehot, table_ref[...],
        preferred_element_type=jnp.float32,
        precision=lax.Precision.HIGHEST,                  # exact f32 gather
    ).astype(out_ref.dtype)


# ---------------------------------------------------------------------------
# Path 2: table stays in HBM; manual row-gather DMAs driven by
# scalar-prefetched token ids, double-buffered across grid steps.
# ---------------------------------------------------------------------------
def _embed_hbm_kernel(padding_idx, vocab_size, tile,
                      tok_smem, tok_ref, table_hbm, out_ref, gbuf, sems):
    i = pl.program_id(0)
    n = pl.num_programs(0)

    def start_gathers(tile_idx, slot):
        @pl.loop(0, tile)
        def _(t):
            tok = tok_smem[tile_idx * tile + t]
            tok = jnp.clip(tok, 0, vocab_size - 1)        # never DMA out of bounds
            pltpu.make_async_copy(
                table_hbm.at[pl.ds(tok, 1), :],
                gbuf.at[slot, pl.ds(t, 1), :],
                sems.at[slot],
            ).start()

    @pl.when(i == 0)                                      # prime slot 0
    def _():
        start_gathers(0, 0)

    @pl.when(i + 1 < n)                                   # prefetch next tile
    def _():
        start_gathers(i + 1, (i + 1) % 2)

    slot = i % 2

    @pl.loop(0, tile)                                     # wait current tile's rows
    def _(t):
        pltpu.make_async_copy(
            table_hbm.at[pl.ds(0, 1), :],
            gbuf.at[slot, pl.ds(t, 1), :],
            sems.at[slot],
        ).wait()

    # Mask multiply in f32 (v5e VPU has no bf16), cast on store.
    keep = (tok_ref[...] != padding_idx).astype(jnp.float32)   # (T, 1)
    rows = gbuf[slot].astype(jnp.float32)                      # (T, D)
    out_ref[...] = (rows * keep).astype(out_ref.dtype)


def word_embedding_forward(tokens, emb_table, padding_idx, drop_rate=0.0,
                           token_tile=256,
                           vmem_table_limit_bytes=4 * 1024 * 1024):
    """Pallas equivalent of WordEmbedding.forward (inference / drop_rate=0)."""
    # TODO(synk): training-mode dropout (drop_rate > 0) would use
    # pltpu.prng_seed + pltpu.prng_random_bits in-kernel; p=0 / eval is identity.
    assert drop_rate == 0.0, "only eval / p=0 dropout implemented in-kernel"

    B, S = tokens.shape
    V, D = emb_table.shape
    N = B * S
    dtype = emb_table.dtype
    itemsize = jnp.dtype(dtype).itemsize

    # Sublane-dense token tile: multiple of 8 rows for f32, 16 for bf16.
    sub = max(8, 32 // itemsize)
    T = max(sub, min(_round_up(token_tile, sub), _round_up(N, sub)))
    N_pad = _round_up(N, T)

    flat = tokens.reshape(N).astype(jnp.int32)
    if N_pad != N:
        pad = jnp.full((N_pad - N,), padding_idx, jnp.int32)
        flat = jnp.concatenate([flat, pad])
    tok2d = flat.reshape(N_pad, 1)
    n_tiles = N_pad // T

    table_bytes = V * D * itemsize

    if table_bytes <= vmem_table_limit_bytes:
        # Small table: VMEM-resident across the whole grid (constant block
        # index => fetched once).  Grid is embarrassingly parallel.
        out = pl.pallas_call(
            functools.partial(_embed_vmem_kernel, padding_idx),
            out_shape=jax.ShapeDtypeStruct((N_pad, D), dtype),
            grid=(n_tiles,),
            in_specs=[
                pl.BlockSpec((T, 1), lambda i: (i, 0)),     # token tile
                pl.BlockSpec((V, D), lambda i: (0, 0)),     # resident table
            ],
            out_specs=pl.BlockSpec((T, D), lambda i: (i, 0)),
            compiler_params=pltpu.CompilerParams(
                dimension_semantics=("parallel",)),
        )(tok2d, emb_table)
    else:
        # Large table: leave it in HBM and gather rows with manual DMAs.
        # "arbitrary": scratch DMAs started in step i are consumed in step
        # i+1, so steps cannot be sharded across cores.
        out = pl.pallas_call(
            functools.partial(_embed_hbm_kernel, padding_idx, V, T),
            out_shape=jax.ShapeDtypeStruct((N_pad, D), dtype),
            grid_spec=pltpu.PrefetchScalarGridSpec(
                num_scalar_prefetch=1,                      # token ids -> SMEM
                grid=(n_tiles,),
                in_specs=[
                    pl.BlockSpec((T, 1), lambda i, tok: (i, 0)),
                    pl.BlockSpec(memory_space=pl.ANY),      # table stays in HBM
                ],
                out_specs=pl.BlockSpec((T, D), lambda i, tok: (i, 0)),
                scratch_shapes=[
                    pltpu.VMEM((2, T, D), dtype),           # gather double-buffer
                    pltpu.SemaphoreType.DMA((2,)),          # one sem per slot
                ],
            ),
            compiler_params=pltpu.CompilerParams(
                dimension_semantics=("arbitrary",)),
        )(flat, tok2d, emb_table)

    return out[:N].reshape(B, S, D)


if __name__ == "__main__":
    # Module hyper-params (small, consistent with __init__ signature).
    vocab_size = 64
    embed_dim = 128
    max_seq_length = 8
    padding_idx = 0
    drop_rate = 0.0            # dropout is identity at p=0 (eval)
    # positional_embedding=None -> no pos-embedding branch

    B, S = 2, max_seq_length

    key = jax.random.PRNGKey(0)
    k_tok, k_emb = jax.random.split(key)

    # Deterministic init: normal(0,1) table, padding row zeroed.  Values are
    # snapped to bf16-representable f32 so the correctness check is exact
    # independent of the MXU's f32 pass count.
    emb_table = jax.random.normal(k_emb, (vocab_size, embed_dim), jnp.float32)
    emb_table = emb_table.astype(jnp.bfloat16).astype(jnp.float32)
    emb_table = emb_table.at[padding_idx].set(0.0)

    # Tokens in [0, vocab); force a few padding tokens.
    tokens = jax.random.randint(k_tok, (B, S), 0, vocab_size, jnp.int32)
    tokens = tokens.at[0, -2:].set(padding_idx)
    tokens = tokens.at[1, -1:].set(padding_idx)

    # Pure-JAX reference.
    ref = jnp.take(emb_table, tokens, axis=0)
    ref = ref * (tokens != padding_idx)[..., None].astype(ref.dtype)

    # Path 1: VMEM-resident table (used automatically for this small vocab).
    out = word_embedding_forward(tokens, emb_table, padding_idx, drop_rate)
    out = jax.block_until_ready(out)
    assert out.shape == (B, S, embed_dim)
    assert jnp.allclose(out, ref, atol=1e-6), "VMEM-path mismatch vs reference"

    # Path 2: force the large-table path (HBM table + manual double-buffered
    # row-gather DMAs) with a small token tile so it exercises >1 grid step.
    out2 = word_embedding_forward(tokens, emb_table, padding_idx, drop_rate,
                                  token_tile=8, vmem_table_limit_bytes=0)
    out2 = jax.block_until_ready(out2)
    assert jnp.allclose(out2, ref, atol=1e-6), "HBM-path mismatch vs reference"

    print("KERNEL_OK")
</pallas_src>

<mosaic_0001>
module attributes {stable_mosaic.version = 11 : i64} {
  func.func @_embed_vmem_kernel(%arg0: i32, %arg1: memref<16x1xi32, #tpu.memory_space<vmem>>, %arg2: memref<64x128xf32, #tpu.memory_space<vmem>>, %arg3: memref<16x128xf32, #tpu.memory_space<vmem>>) attributes {dimension_semantics = [#tpu.dimension_semantics<parallel>], iteration_bounds = array<i64: 1>, scalar_prefetch = 0 : i64, scratch_operands = 0 : i64, tpu.core_type = #tpu.core_type<tc>, window_params = [{transform_indices = @transform_0, window_bounds = array<i64: 16, 1>}, {pipeline_mode = #tpu.pipeline_mode<synchronous>, transform_indices = @transform_1, window_bounds = array<i64: 64, 128>}, {transform_indices = @transform_2, window_bounds = array<i64: 16, 128>}]} {
    %c0 = arith.constant 0 : index
    %c0_0 = arith.constant 0 : index
    %0 = vector.load %arg1[%c0, %c0_0] : memref<16x1xi32, #tpu.memory_space<vmem>>, vector<16x1xi32>
    %1 = tpu.iota {dimensions = array<i32: 1>} : vector<16x64xi32>
    %2 = vector.broadcast %0 : vector<16x1xi32> to vector<16x64xi32>
    %3 = arith.cmpi eq, %1, %2 : vector<16x64xi32>
    %c0_i32 = arith.constant 0 : i32
    %4 = vector.broadcast %c0_i32 : i32 to vector<16x1xi32>
    %5 = arith.cmpi ne, %0, %4 : vector<16x1xi32>
    %6 = vector.broadcast %5 : vector<16x1xi1> to vector<16x64xi1>
    %7 = arith.andi %3, %6 : vector<16x64xi1>
    %8 = arith.extui %7 : vector<16x64xi1> to vector<16x64xi32>
    %9 = arith.sitofp %8 : vector<16x64xi32> to vector<16x64xf32>
    %c0_1 = arith.constant 0 : index
    %c0_2 = arith.constant 0 : index
    %10 = vector.load %arg2[%c0_1, %c0_2] : memref<64x128xf32, #tpu.memory_space<vmem>>, vector<64x128xf32>
    %cst = arith.constant dense<0.000000e+00> : vector<16x128xf32>
    %11 = tpu.matmul %9, %10, %cst {dimension_numbers = #tpu.dot_dimension_numbers<[1], [0], [0], [1], [0, 0, 1, 1], [], []>, precision = #tpu.contract_precision<fp32>} : vector<16x64xf32>, vector<64x128xf32>, vector<16x128xf32> -> vector<16x128xf32>
    %c0_3 = arith.constant 0 : index
    %c0_4 = arith.constant 0 : index
    %12 = vector.load %arg3[%c0_3, %c0_4] : memref<16x128xf32, #tpu.memory_space<vmem>>, vector<16x128xf32>
    tpu.vector_store %arg3[%c0_3, %c0_4], %11 {strides = array<i32>} : memref<16x128xf32, #tpu.memory_space<vmem>>, vector<16x128xf32>,
    return
  }
  func.func @transform_0(%arg0: i32) -> (i32, i32) {
    %c0_i32 = arith.constant 0 : i32
    %c0_i32_0 = arith.constant 0 : i32
    return %arg0, %c0_i32 : i32, i32
  }
  func.func @transform_1(%arg0: i32) -> (i32, i32) {
    %c0_i32 = arith.constant 0 : i32
    %c0_i32_0 = arith.constant 0 : i32
    %c0_i32_1 = arith.constant 0 : i32
    return %c0_i32, %c0_i32_0 : i32, i32
  }
  func.func @transform_2(%arg0: i32) -> (i32, i32) {
    %c0_i32 = arith.constant 0 : i32
    %c0_i32_0 = arith.constant 0 : i32
    return %arg0, %c0_i32 : i32, i32
  }
}

</mosaic_0001>

<llo_original>
// kernel: tpu_custom_call.1
$region0: #{tpu_custom_call.1}
  #allocation0 [shape = 'u32[]', space=smem, size = 0x4, offset = 0x4, fixed_abs, tag = 'smem constant byte address 0x4 - core index']
  #allocation1 [shape = 'u32[144,128]{1,0:T(1,128)}', space=vmem, size = 0x12000, scoped, tag = 'internal scratch']
  %s0 = inlined_call_operand.vmem [shape: s32[16,1], index: 0, kind: input, shape index: {}]
  %s1 = inlined_call_operand.hbm [shape: f32[64,128], index: 1, kind: input, shape index: {}]
  %s2 = inlined_call_operand.hbm [shape: f32[16,128], index: 2, kind: output, shape index: {}]
  %s3 = sld [smem:[#allocation0]]
  $region22: #{tpu_custom_call.1} parent=0
    _
  %s5 = ssub.s32 1, %s3
  %s6 = scalar_select 0, %s5, %s3
  $region1: #{tpu_custom_call.1} parent=0
    #allocation2 [shape = 'u8[32768]{0}', space=vmem, size = 0x8000, scoped, tag = 'input window, operand 1, single buffered']
    #allocation3 [shape = 's32[1]{0}', space=sflag, size = 0x4, scoped, tag = 'scoped memory for tpu_custom_call.1']
    #allocation4 [shape = 's32[1]{0}', space=sflag, size = 0x4, scoped, tag = 'scoped memory for tpu_custom_call.1']
    #allocation5 [shape = 'u8[8192]{0}', space=vmem, size = 0x2000, scoped, tag = 'output window, operand 0, single buffered']
    %7 = vsyncpa [#allocation3], 0
    %8 = vsyncpa [#allocation4], 0
    // Predicated region
    $region2: #{tpu_custom_call.1} parent=1 // pred_check
      _
    $region3: #{tpu_custom_call.1} parent=1 // pred_check_branch
      %10 = sbr.rel (0) target = $region5
    $region4: #{tpu_custom_call.1} parent=1 // pred_region
      _
    $region5: #{tpu_custom_call.1} parent=1 // pred_fallthru
      _
    // Predicated region
    $region6: #{tpu_custom_call.1} parent=1 // pred_check
      _
    $region7: #{tpu_custom_call.1} parent=1 // pred_check_branch
      %12 = sbr.rel (0) target = $region9
    $region8: #{tpu_custom_call.1} parent=1 // pred_region
      %s14 = ssub.s32 1024, 1024
      %15 = vsyncadd [#allocation3], %s14
      %s16 = sshll.u32 [#allocation2], 4
      %s17 = int_to_ptr.vmem [resolvable:$true] %s16
      %22 = dma.hbm_to_vmem [thread:$0]  %s1, 1024, %s17, [#allocation3], 128, 128, 8
    $region9: #{tpu_custom_call.1} parent=1 // pred_fallthru
      _
    // Predicated region
    $region10: #{tpu_custom_call.1} parent=1 // pred_check
      _
    $region11: #{tpu_custom_call.1} parent=1 // pred_check_branch
      %24 = sbr.rel (0) target = $region13
    $region12: #{tpu_custom_call.1} parent=1 // pred_region
      %25 = dma.done [#allocation3], 1024
    $region13: #{tpu_custom_call.1} parent=1 // pred_fallthru
      _
    %v26 = vld [vmem:[%s0] sm:$0xff]
    %v27 = vld [vmem:[%s0 + $0x8] sm:$0xff]
    %v28 = vlaneseq
    %v29 = vand.u32 %v28, 127
    %30 = vset.pattern.permute.xlu0 0
    %31 = vperm.xlu0 %30, %v26
    %v32 = vpop.permute.xlu0 %31
    %33 = vset.pattern.permute.xlu0 0
    %34 = vperm.xlu0 %33, %v27
    %v35 = vpop.permute.xlu0 %34
    %vm36 = vcmp.eq.s32.totalorder %v29, %v32
    %vm37 = vcmp.eq.s32.totalorder %v29, %v35
    %vm38 = vcmp.ne.s32.totalorder %v26, 0
    %vm39 = vcmp.ne.s32.totalorder %v27, 0
    %v40 = vsel %vm38, 1, 0
    %v41 = vsel %vm39, 1, 0
    %42 = vset.pattern.permute.xlu0 0
    %43 = vperm.xlu0 %42, %v40
    %v44 = vpop.permute.xlu0 %43
    %45 = vset.pattern.permute.xlu0 0
    %46 = vperm.xlu0 %45, %v41
    %v47 = vpop.permute.xlu0 %46
    %vm48 = vcmp.eq.s32.totalorder %v44, 1
    %vm49 = vcmp.eq.s32.totalorder %v47, 1
    %vm50 = vmand %vm36, %vm48
    %vm51 = vmand %vm37, %vm49
    %v52 = vsel %vm50, 1, 0
    %v53 = vsel %vm51, 1, 0
    %v54 = vcvt.s32.f32 %v52
    %v55 = vcvt.s32.f32 %v53
    %v56 = vld [vmem:[#allocation2] sm:$0xff]
    %v57 = vld [vmem:[#allocation2 + $0x8] sm:$0xff]
    %v58 = vld [vmem:[#allocation2 + $0x10] sm:$0xff]
    %v59 = vld [vmem:[#allocation2 + $0x18] sm:$0xff]
    %v60 = vld [vmem:[#allocation2 + $0x20] sm:$0xff]
    %v61 = vld [vmem:[#allocation2 + $0x28] sm:$0xff]
    %v62 = vld [vmem:[#allocation2 + $0x30] sm:$0xff]
    %v63 = vld [vmem:[#allocation2 + $0x38] sm:$0xff]
    %vm64 = vcmask 523264
    %v66 = vsel %vm64, %v54, 0
    %v69 = vsel %vm64, %v55, 0
    %71 = vmatprep.subr.mxu0 0.0
    %v72 = vand.u32 %v56, 4294901760
    %73 = vmatpush1.msra.mxu0 %v72
    %74 = vmatprep.subr.mxu0 0.0
    %v75 = vand.u32 %v57, 4294901760
    %76 = vmatpush1.msra.mxu0 %v75
    %77 = vmatprep.subr.mxu0 0.0
    %v78 = vand.u32 %v58, 4294901760
    %79 = vmatpush1.msra.mxu0 %v78
    %80 = vmatprep.subr.mxu0 0.0
    %v81 = vand.u32 %v59, 4294901760
    %82 = vmatpush1.msra.mxu0 %v81
    %83 = vmatprep.subr.mxu0 0.0
    %v84 = vand.u32 %v60, 4294901760
    %85 = vmatpush1.msra.mxu0 %v84
    %86 = vmatprep.subr.mxu0 0.0
    %v87 = vand.u32 %v61, 4294901760
    %88 = vmatpush1.msra.mxu0 %v87
    %89 = vmatprep.subr.mxu0 0.0
    %v90 = vand.u32 %v62, 4294901760
    %91 = vmatpush1.msra.mxu0 %v90
    %92 = vmatprep.subr.mxu0 0.0
    %v93 = vand.u32 %v63, 4294901760
    %94 = vmatpush1.msra.mxu0 %v93
    %95 = vmatprep.subr.mxu0 0.0
    %96 = vmatpush1.msra.mxu0 0.0
    %97 = vmatprep.subr.mxu0 0.0
    %98 = vmatpush1.msra.mxu0 0.0
    %99 = vmatprep.subr.mxu0 0.0
    %100 = vmatpush1.msra.mxu0 0.0
    %101 = vmatprep.subr.mxu0 0.0
    %102 = vmatpush1.msra.mxu0 0.0
    %103 = vmatprep.subr.mxu0 0.0
    %104 = vmatpush1.msra.mxu0 0.0
    %105 = vmatprep.subr.mxu0 0.0
    %106 = vmatpush1.msra.mxu0 0.0
    %107 = vmatprep.subr.mxu0 0.0
    %108 = vmatpush1.msra.mxu0 0.0
    %109 = vmatprep.subr.mxu0 0.0
    %110 = vmatpush1.msra.mxu0 0.0
    %111 = vmatprep.subr.mxu0 0.0
    %112 = vmatpush1.msra.mxu0 0.0
    %113 = vmatprep.subr.mxu0 0.0
    %114 = vmatpush1.msra.mxu0 0.0
    %115 = vmatprep.subr.mxu0 0.0
    %116 = vmatpush1.msra.mxu0 0.0
    %117 = vmatprep.subr.mxu0 0.0
    %118 = vmatpush1.msra.mxu0 0.0
    %119 = vmatprep.subr.mxu0 0.0
    %120 = vmatpush1.msra.mxu0 0.0
    %121 = vmatprep.subr.mxu0 0.0
    %122 = vmatpush1.msra.mxu0 0.0
    %123 = vmatprep.subr.mxu0 0.0
    %124 = vmatpush1.msra.mxu0 0.0
    %125 = vmatprep.subr.mxu0 0.0
    %126 = vmatpush1.msra.mxu0 0.0
    %127 = vmatprep.subr.mxu0 0.0
    %128 = vmatpush1.msra.mxu0 0.0
    %129 = vmatprep.subr.mxu0 0.0
    %130 = vmatpush1.msra.mxu0 0.0
    %131 = vmatprep.subr.mxu0 0.0
    %132 = vmatpush1.msra.mxu0 0.0
    %133 = vmatprep.subr.mxu0 0.0
    %134 = vmatpush1.msra.mxu0 0.0
    %135 = vmatprep.subr.mxu0 0.0
    %136 = vmatpush1.msra.mxu0 0.0
    %137 = vmatprep.subr.mxu0 0.0
    %138 = vmatpush1.msra.mxu0 0.0
    %139 = vmatprep.subr.mxu0 0.0
    %140 = vmatpush1.msra.mxu0 0.0
    %141 = vmatprep.subr.mxu0 0.0
    %142 = vmatpush1.msra.mxu0 0.0
    %143 = vmatprep.mubr.f32.mxu0 0.0
    %v144 = vand.u32 %v66, 4294901760
    %v145 = vsub.f32 %v66, %v144
    %v146 = vand.u32 %v145, 4294901760
    %v147 = vsub.f32 %v145, %v146
    %v148 = vand.u32 %v147, 4294901760
    %149 = vmatmul.mubr.f32.gmra.mrb[0].mxu0 %v148
    %v150 = vpop.f32.mrb[0].mxu0
    %v151 = vadd.f32 0.0, %v150
    %v152 = vpop.f32.mrb[0].mxu0
    %153 = vmatprep.mubr.f32.mxu0 0.0
    %v154 = vand.u32 %v69, 4294901760
    %v155 = vsub.f32 %v69, %v154
    %v156 = vand.u32 %v155, 4294901760
    %v157 = vsub.f32 %v155, %v156
    %v158 = vand.u32 %v157, 4294901760
    %159 = vmatmul.mubr.f32.gmra.mrb[0].mxu0 %v158
    %v160 = vpop.f32.mrb[0].mxu0
    %v161 = vadd.f32 0.0, %v160
    %v162 = vpop.f32.mrb[0].mxu0
    %163 = vdwg.mxu0
    %164 = vmatprep.subr.mxu0 0.0
    %v165 = vand.u32 %v56, 4294901760
    %v166 = vsub.f32 %v56, %v165
    %v167 = vand.u32 %v166, 4294901760
    %v168 = vsub.f32 %v166, %v167
    %v169 = vand.u32 %v168, 4294901760
    %170 = vmatpush1.msra.mxu0 %v169
    %171 = vmatprep.subr.mxu0 0.0
    %v172 = vand.u32 %v57, 4294901760
    %v173 = vsub.f32 %v57, %v172
    %v174 = vand.u32 %v173, 4294901760
    %v175 = vsub.f32 %v173, %v174
    %v176 = vand.u32 %v175, 4294901760
    %177 = vmatpush1.msra.mxu0 %v176
    %178 = vmatprep.subr.mxu0 0.0
    %v179 = vand.u32 %v58, 4294901760
    %v180 = vsub.f32 %v58, %v179
    %v181 = vand.u32 %v180, 4294901760
    %v182 = vsub.f32 %v180, %v181
    %v183 = vand.u32 %v182, 4294901760
    %184 = vmatpush1.msra.mxu0 %v183
    %185 = vmatprep.subr.mxu0 0.0
    %v186 = vand.u32 %v59, 4294901760
    %v187 = vsub.f32 %v59, %v186
    %v188 = vand.u32 %v187, 4294901760
    %v189 = vsub.f32 %v187, %v188
    %v190 = vand.u32 %v189, 4294901760
    %191 = vmatpush1.msra.mxu0 %v190
    %192 = vmatprep.subr.mxu0 0.0
    %v193 = vand.u32 %v60, 4294901760
    %v194 = vsub.f32 %v60, %v193
    %v195 = vand.u32 %v194, 4294901760
    %v196 = vsub.f32 %v194, %v195
    %v197 = vand.u32 %v196, 4294901760
    %198 = vmatpush1.msra.mxu0 %v197
    %199 = vmatprep.subr.mxu0 0.0
    %v200 = vand.u32 %v61, 4294901760
    %v201 = vsub.f32 %v61, %v200
    %v202 = vand.u32 %v201, 4294901760
    %v203 = vsub.f32 %v201, %v202
    %v204 = vand.u32 %v203, 4294901760
    %205 = vmatpush1.msra.mxu0 %v204
    %206 = vmatprep.subr.mxu0 0.0
    %v207 = vand.u32 %v62, 4294901760
    %v208 = vsub.f32 %v62, %v207
    %v209 = vand.u32 %v208, 4294901760
    %v210 = vsub.f32 %v208, %v209
    %v211 = vand.u32 %v210, 4294901760
    %212 = vmatpush1.msra.mxu0 %v211
    %213 = vmatprep.subr.mxu0 0.0
    %v214 = vand.u32 %v63, 4294901760
    %v215 = vsub.f32 %v63, %v214
    %v216 = vand.u32 %v215, 4294901760
    %v217 = vsub.f32 %v215, %v216
    %v218 = vand.u32 %v217, 4294901760
    %219 = vmatpush1.msra.mxu0 %v218
    %220 = vmatprep.subr.mxu0 0.0
    %221 = vmatpush1.msra.mxu0 0.0
    %222 = vmatprep.subr.mxu0 0.0
    %223 = vmatpush1.msra.mxu0 0.0
    %224 = vmatprep.subr.mxu0 0.0
    %225 = vmatpush1.msra.mxu0 0.0
    %226 = vmatprep.subr.mxu0 0.0
    %227 = vmatpush1.msra.mxu0 0.0
    %228 = vmatprep.subr.mxu0 0.0
    %229 = vmatpush1.msra.mxu0 0.0
    %230 = vmatprep.subr.mxu0 0.0
    %231 = vmatpush1.msra.mxu0 0.0
    %232 = vmatprep.subr.mxu0 0.0
    %233 = vmatpush1.msra.mxu0 0.0
    %234 = vmatprep.subr.mxu0 0.0
    %235 = vmatpush1.msra.mxu0 0.0
    %236 = vmatprep.subr.mxu0 0.0
    %237 = vmatpush1.msra.mxu0 0.0
    %238 = vmatprep.subr.mxu0 0.0
    %239 = vmatpush1.msra.mxu0 0.0
    %240 = vmatprep.subr.mxu0 0.0
    %241 = vmatpush1.msra.mxu0 0.0
    %242 = vmatprep.subr.mxu0 0.0
    %243 = vmatpush1.msra.mxu0 0.0
    %244 = vmatprep.subr.mxu0 0.0
    %245 = vmatpush1.msra.mxu0 0.0
    %246 = vmatprep.subr.mxu0 0.0
    %247 = vmatpush1.msra.mxu0 0.0
    %248 = vmatprep.subr.mxu0 0.0
    %249 = vmatpush1.msra.mxu0 0.0
    %250 = vmatprep.subr.mxu0 0.0
    %251 = vmatpush1.msra.mxu0 0.0
    %252 = vmatprep.subr.mxu0 0.0
    %253 = vmatpush1.msra.mxu0 0.0
    %254 = vmatprep.subr.mxu0 0.0
    %255 = vmatpush1.msra.mxu0 0.0
    %256 = vmatprep.subr.mxu0 0.0
    %257 = vmatpush1.msra.mxu0 0.0
    %258 = vmatprep.subr.mxu0 0.0
    %259 = vmatpush1.msra.mxu0 0.0
    %260 = vmatprep.subr.mxu0 0.0
    %261 = vmatpush1.msra.mxu0 0.0
    %262 = vmatprep.subr.mxu0 0.0
    %263 = vmatpush1.msra.mxu0 0.0
    %264 = vmatprep.subr.mxu0 0.0
    %265 = vmatpush1.msra.mxu0 0.0
    %266 = vmatprep.subr.mxu0 0.0
    %267 = vmatpush1.msra.mxu0 0.0
    %268 = vmatprep.mubr.f32.mxu0 0.0
    %v269 = vand.u32 %v66, 4294901760
    %270 = vmatmul.mubr.f32.gmra.mrb[0].mxu0 %v269
    %v271 = vpop.f32.mrb[0].mxu0
    %v272 = vadd.f32 %v151, %v271
    %v273 = vpop.f32.mrb[0].mxu0
    %274 = vmatprep.mubr.f32.mxu0 0.0
    %v275 = vand.u32 %v69, 4294901760
    %276 = vmatmul.mubr.f32.gmra.mrb[0].mxu0 %v275
    %v277 = vpop.f32.mrb[0].mxu0
    %v278 = vadd.f32 %v161, %v277
    %v279 = vpop.f32.mrb[0].mxu0
    %280 = vdwg.mxu0
    %281 = vmatprep.subr.mxu0 0.0
    %v282 = vand.u32 %v56, 4294901760
    %v283 = vsub.f32 %v56, %v282
    %284 = vmatpush1.msra.mxu0 %v283
    %285 = vmatprep.subr.mxu0 0.0
    %v286 = vand.u32 %v57, 4294901760
    %v287 = vsub.f32 %v57, %v286
    %288 = vmatpush1.msra.mxu0 %v287
    %289 = vmatprep.subr.mxu0 0.0
    %v290 = vand.u32 %v58, 4294901760
    %v291 = vsub.f32 %v58, %v290
    %292 = vmatpush1.msra.mxu0 %v291
    %293 = vmatprep.subr.mxu0 0.0
    %v294 = vand.u32 %v59, 4294901760
    %v295 = vsub.f32 %v59, %v294
    %296 = vmatpush1.msra.mxu0 %v295
    %297 = vmatprep.subr.mxu0 0.0
    %v298 = vand.u32 %v60, 4294901760
    %v299 = vsub.f32 %v60, %v298
    %300 = vmatpush1.msra.mxu0 %v299
    %301 = vmatprep.subr.mxu0 0.0
    %v302 = vand.u32 %v61, 4294901760
    %v303 = vsub.f32 %v61, %v302
    %304 = vmatpush1.msra.mxu0 %v303
    %305 = vmatprep.subr.mxu0 0.0
    %v306 = vand.u32 %v62, 4294901760
    %v307 = vsub.f32 %v62, %v306
    %308 = vmatpush1.msra.mxu0 %v307
    %309 = vmatprep.subr.mxu0 0.0
    %v310 = vand.u32 %v63, 4294901760
    %v311 = vsub.f32 %v63, %v310
    %312 = vmatpush1.msra.mxu0 %v311
    %313 = vmatprep.subr.mxu0 0.0
    %314 = vmatpush1.msra.mxu0 0.0
    %315 = vmatprep.subr.mxu0 0.0
    %316 = vmatpush1.msra.mxu0 0.0
    %317 = vmatprep.subr.mxu0 0.0
    %318 = vmatpush1.msra.mxu0 0.0
    %319 = vmatprep.subr.mxu0 0.0
    %320 = vmatpush1.msra.mxu0 0.0
    %321 = vmatprep.subr.mxu0 0.0
    %322 = vmatpush1.msra.mxu0 0.0
    %323 = vmatprep.subr.mxu0 0.0
    %324 = vmatpush1.msra.mxu0 0.0
    %325 = vmatprep.subr.mxu0 0.0
    %326 = vmatpush1.msra.mxu0 0.0
    %327 = vmatprep.subr.mxu0 0.0
    %328 = vmatpush1.msra.mxu0 0.0
    %329 = vmatprep.subr.mxu0 0.0
    %330 = vmatpush1.msra.mxu0 0.0
    %331 = vmatprep.subr.mxu0 0.0
    %332 = vmatpush1.msra.mxu0 0.0
    %333 = vmatprep.subr.mxu0 0.0
    %334 = vmatpush1.msra.mxu0 0.0
    %335 = vmatprep.subr.mxu0 0.0
    %336 = vmatpush1.msra.mxu0 0.0
    %337 = vmatprep.subr.mxu0 0.0
    %338 = vmatpush1.msra.mxu0 0.0
    %339 = vmatprep.subr.mxu0 0.0
    %340 = vmatpush1.msra.mxu0 0.0
    %341 = vmatprep.subr.mxu0 0.0
    %342 = vmatpush1.msra.mxu0 0.0
    %343 = vmatprep.subr.mxu0 0.0
    %344 = vmatpush1.msra.mxu0 0.0
    %345 = vmatprep.subr.mxu0 0.0
    %346 = vmatpush1.msra.mxu0 0.0
    %347 = vmatprep.subr.mxu0 0.0
    %348 = vmatpush1.msra.mxu0 0.0
    %349 = vmatprep.subr.mxu0 0.0
    %350 = vmatpush1.msra.mxu0 0.0
    %351 = vmatprep.subr.mxu0 0.0
    %352 = vmatpush1.msra.mxu0 0.0
    %353 = vmatprep.subr.mxu0 0.0
    %354 = vmatpush1.msra.mxu0 0.0
    %355 = vmatprep.subr.mxu0 0.0
    %356 = vmatpush1.msra.mxu0 0.0
    %357 = vmatprep.subr.mxu0 0.0
    %358 = vmatpush1.msra.mxu0 0.0
    %359 = vmatprep.subr.mxu0 0.0
    %360 = vmatpush1.msra.mxu0 0.0
    %361 = vmatprep.mubr.f32.mxu0 0.0
    %v362 = vand.u32 %v66, 4294901760
    %v363 = vsub.f32 %v66, %v362
    %364 = vmatmul.mubr.f32.gmra.mrb[0].mxu0 %v363
    %v365 = vpop.f32.mrb[0].mxu0
    %v366 = vadd.f32 %v272, %v365
    %v367 = vpop.f32.mrb[0].mxu0
    %368 = vmatprep.mubr.f32.mxu0 0.0
    %v369 = vand.u32 %v69, 4294901760
    %v370 = vsub.f32 %v69, %v369
    %371 = vmatmul.mubr.f32.gmra.mrb[0].mxu0 %v370
    %v372 = vpop.f32.mrb[0].mxu0
    %v373 = vadd.f32 %v278, %v372
    %v374 = vpop.f32.mrb[0].mxu0
    %375 = vdwg.mxu0
    %376 = vmatprep.subr.mxu0 0.0
    %v377 = vand.u32 %v56, 4294901760
    %378 = vmatpush1.msra.mxu0 %v377
    %379 = vmatprep.subr.mxu0 0.0
    %v380 = vand.u32 %v57, 4294901760
    %381 = vmatpush1.msra.mxu0 %v380
    %382 = vmatprep.subr.mxu0 0.0
    %v383 = vand.u32 %v58, 4294901760
    %384 = vmatpush1.msra.mxu0 %v383
    %385 = vmatprep.subr.mxu0 0.0
    %v386 = vand.u32 %v59, 4294901760
    %387 = vmatpush1.msra.mxu0 %v386
    %388 = vmatprep.subr.mxu0 0.0
    %v389 = vand.u32 %v60, 4294901760
    %390 = vmatpush1.msra.mxu0 %v389
    %391 = vmatprep.subr.mxu0 0.0
    %v392 = vand.u32 %v61, 4294901760
    %393 = vmatpush1.msra.mxu0 %v392
    %394 = vmatprep.subr.mxu0 0.0
    %v395 = vand.u32 %v62, 4294901760
    %396 = vmatpush1.msra.mxu0 %v395
    %397 = vmatprep.subr.mxu0 0.0
    %v398 = vand.u32 %v63, 4294901760
    %399 = vmatpush1.msra.mxu0 %v398
    %400 = vmatprep.subr.mxu0 0.0
    %401 = vmatpush1.msra.mxu0 0.0
    %402 = vmatprep.subr.mxu0 0.0
    %403 = vmatpush1.msra.mxu0 0.0
    %404 = vmatprep.subr.mxu0 0.0
    %405 = vmatpush1.msra.mxu0 0.0
    %406 = vmatprep.subr.mxu0 0.0
    %407 = vmatpush1.msra.mxu0 0.0
    %408 = vmatprep.subr.mxu0 0.0
    %409 = vmatpush1.msra.mxu0 0.0
    %410 = vmatprep.subr.mxu0 0.0
    %411 = vmatpush1.msra.mxu0 0.0
    %412 = vmatprep.subr.mxu0 0.0
    %413 = vmatpush1.msra.mxu0 0.0
    %414 = vmatprep.subr.mxu0 0.0
    %415 = vmatpush1.msra.mxu0 0.0
    %416 = vmatprep.subr.mxu0 0.0
    %417 = vmatpush1.msra.mxu0 0.0
    %418 = vmatprep.subr.mxu0 0.0
    %419 = vmatpush1.msra.mxu0 0.0
    %420 = vmatprep.subr.mxu0 0.0
    %421 = vmatpush1.msra.mxu0 0.0
    %422 = vmatprep.subr.mxu0 0.0
    %423 = vmatpush1.msra.mxu0 0.0
    %424 = vmatprep.subr.mxu0 0.0
    %425 = vmatpush1.msra.mxu0 0.0
    %426 = vmatprep.subr.mxu0 0.0
    %427 = vmatpush1.msra.mxu0 0.0
    %428 = vmatprep.subr.mxu0 0.0
    %429 = vmatpush1.msra.mxu0 0.0
    %430 = vmatprep.subr.mxu0 0.0
    %431 = vmatpush1.msra.mxu0 0.0
    %432 = vmatprep.subr.mxu0 0.0
    %433 = vmatpush1.msra.mxu0 0.0
    %434 = vmatprep.subr.mxu0 0.0
    %435 = vmatpush1.msra.mxu0 0.0
    %436 = vmatprep.subr.mxu0 0.0
    %437 = vmatpush1.msra.mxu0 0.0
    %438 = vmatprep.subr.mxu0 0.0
    %439 = vmatpush1.msra.mxu0 0.0
    %440 = vmatprep.subr.mxu0 0.0
    %441 = vmatpush1.msra.mxu0 0.0
    %442 = vmatprep.subr.mxu0 0.0
    %443 = vmatpush1.msra.mxu0 0.0
    %444 = vmatprep.subr.mxu0 0.0
    %445 = vmatpush1.msra.mxu0 0.0
    %446 = vmatprep.subr.mxu0 0.0
    %447 = vmatpush1.msra.mxu0 0.0
    %448 = vmatprep.mubr.f32.mxu0 0.0
    %v449 = vand.u32 %v66, 4294901760
    %v450 = vsub.f32 %v66, %v449
    %v451 = vand.u32 %v450, 4294901760
    %452 = vmatmul.mubr.f32.gmra.mrb[0].mxu0 %v451
    %v453 = vpop.f32.mrb[0].mxu0
    %v454 = vadd.f32 %v366, %v453
    %v455 = vpop.f32.mrb[0].mxu0
    %456 = vmatprep.mubr.f32.mxu0 0.0
    %v457 = vand.u32 %v69, 4294901760
    %v458 = vsub.f32 %v69, %v457
    %v459 = vand.u32 %v458, 4294901760
    %460 = vmatmul.mubr.f32.gmra.mrb[0].mxu0 %v459
    %v461 = vpop.f32.mrb[0].mxu0
    %v462 = vadd.f32 %v373, %v461
    %v463 = vpop.f32.mrb[0].mxu0
    %464 = vdwg.mxu0
    %465 = vmatprep.subr.mxu0 0.0
    %v466 = vand.u32 %v56, 4294901760
    %v467 = vsub.f32 %v56, %v466
    %v468 = vand.u32 %v467, 4294901760
    %469 = vmatpush1.msra.mxu0 %v468
    %470 = vmatprep.subr.mxu0 0.0
    %v471 = vand.u32 %v57, 4294901760
    %v472 = vsub.f32 %v57, %v471
    %v473 = vand.u32 %v472, 4294901760
    %474 = vmatpush1.msra.mxu0 %v473
    %475 = vmatprep.subr.mxu0 0.0
    %v476 = vand.u32 %v58, 4294901760
    %v477 = vsub.f32 %v58, %v476
    %v478 = vand.u32 %v477, 4294901760
    %479 = vmatpush1.msra.mxu0 %v478
    %480 = vmatprep.subr.mxu0 0.0
    %v481 = vand.u32 %v59, 4294901760
    %v482 = vsub.f32 %v59, %v481
    %v483 = vand.u32 %v482, 4294901760
    %484 = vmatpush1.msra.mxu0 %v483
    %485 = vmatprep.subr.mxu0 0.0
    %v486 = vand.u32 %v60, 4294901760
    %v487 = vsub.f32 %v60, %v486
    %v488 = vand.u32 %v487, 4294901760
    %489 = vmatpush1.msra.mxu0 %v488
    %490 = vmatprep.subr.mxu0 0.0
    %v491 = vand.u32 %v61, 4294901760
    %v492 = vsub.f32 %v61, %v491
    %v493 = vand.u32 %v492, 4294901760
    %494 = vmatpush1.msra.mxu0 %v493
    %495 = vmatprep.subr.mxu0 0.0
    %v496 = vand.u32 %v62, 4294901760
    %v497 = vsub.f32 %v62, %v496
    %v498 = vand.u32 %v497, 4294901760
    %499 = vmatpush1.msra.mxu0 %v498
    %500 = vmatprep.subr.mxu0 0.0
    %v501 = vand.u32 %v63, 4294901760
    %v502 = vsub.f32 %v63, %v501
    %v503 = vand.u32 %v502, 4294901760
    %504 = vmatpush1.msra.mxu0 %v503
    %505 = vmatprep.subr.mxu0 0.0
    %506 = vmatpush1.msra.mxu0 0.0
    %507 = vmatprep.subr.mxu0 0.0
    %508 = vmatpush1.msra.mxu0 0.0
    %509 = vmatprep.subr.mxu0 0.0
    %510 = vmatpush1.msra.mxu0 0.0
    %511 = vmatprep.subr.mxu0 0.0
    %512 = vmatpush1.msra.mxu0 0.0
    %513 = vmatprep.subr.mxu0 0.0
    %514 = vmatpush1.msra.mxu0 0.0
    %515 = vmatprep.subr.mxu0 0.0
    %516 = vmatpush1.msra.mxu0 0.0
    %517 = vmatprep.subr.mxu0 0.0
    %518 = vmatpush1.msra.mxu0 0.0
    %519 = vmatprep.subr.mxu0 0.0
    %520 = vmatpush1.msra.mxu0 0.0
    %521 = vmatprep.subr.mxu0 0.0
    %522 = vmatpush1.msra.mxu0 0.0
    %523 = vmatprep.subr.mxu0 0.0
    %524 = vmatpush1.msra.mxu0 0.0
    %525 = vmatprep.subr.mxu0 0.0
    %526 = vmatpush1.msra.mxu0 0.0
    %527 = vmatprep.subr.mxu0 0.0
    %528 = vmatpush1.msra.mxu0 0.0
    %529 = vmatprep.subr.mxu0 0.0
    %530 = vmatpush1.msra.mxu0 0.0
    %531 = vmatprep.subr.mxu0 0.0
    %532 = vmatpush1.msra.mxu0 0.0
    %533 = vmatprep.subr.mxu0 0.0
    %534 = vmatpush1.msra.mxu0 0.0
    %535 = vmatprep.subr.mxu0 0.0
    %536 = vmatpush1.msra.mxu0 0.0
    %537 = vmatprep.subr.mxu0 0.0
    %538 = vmatpush1.msra.mxu0 0.0
    %539 = vmatprep.subr.mxu0 0.0
    %540 = vmatpush1.msra.mxu0 0.0
    %541 = vmatprep.subr.mxu0 0.0
    %542 = vmatpush1.msra.mxu0 0.0
    %543 = vmatprep.subr.mxu0 0.0
    %544 = vmatpush1.msra.mxu0 0.0
    %545 = vmatprep.subr.mxu0 0.0
    %546 = vmatpush1.msra.mxu0 0.0
    %547 = vmatprep.subr.mxu0 0.0
    %548 = vmatpush1.msra.mxu0 0.0
    %549 = vmatprep.subr.mxu0 0.0
    %550 = vmatpush1.msra.mxu0 0.0
    %551 = vmatprep.subr.mxu0 0.0
    %552 = vmatpush1.msra.mxu0 0.0
    %553 = vmatprep.mubr.f32.mxu0 0.0
    %v554 = vand.u32 %v66, 4294901760
    %555 = vmatmul.mubr.f32.gmra.mrb[0].mxu0 %v554
    %v556 = vpop.f32.mrb[0].mxu0
    %v557 = vadd.f32 %v454, %v556
    %v558 = vpop.f32.mrb[0].mxu0
    %559 = vmatprep.mubr.f32.mxu0 0.0
    %v560 = vand.u32 %v69, 4294901760
    %561 = vmatmul.mubr.f32.gmra.mrb[0].mxu0 %v560
    %v562 = vpop.f32.mrb[0].mxu0
    %v563 = vadd.f32 %v462, %v562
    %v564 = vpop.f32.mrb[0].mxu0
    %565 = vdwg.mxu0
    %566 = vmatprep.subr.mxu0 0.0
    %v567 = vand.u32 %v56, 4294901760
    %568 = vmatpush1.msra.mxu0 %v567
    %569 = vmatprep.subr.mxu0 0.0
    %v570 = vand.u32 %v57, 4294901760
    %571 = vmatpush1.msra.mxu0 %v570
    %572 = vmatprep.subr.mxu0 0.0
    %v573 = vand.u32 %v58, 4294901760
    %574 = vmatpush1.msra.mxu0 %v573
    %575 = vmatprep.subr.mxu0 0.0
    %v576 = vand.u32 %v59, 4294901760
    %577 = vmatpush1.msra.mxu0 %v576
    %578 = vmatprep.subr.mxu0 0.0
    %v579 = vand.u32 %v60, 4294901760
    %580 = vmatpush1.msra.mxu0 %v579
    %581 = vmatprep.subr.mxu0 0.0
    %v582 = vand.u32 %v61, 4294901760
    %583 = vmatpush1.msra.mxu0 %v582
    %584 = vmatprep.subr.mxu0 0.0
    %v585 = vand.u32 %v62, 4294901760
    %586 = vmatpush1.msra.mxu0 %v585
    %587 = vmatprep.subr.mxu0 0.0
    %v588 = vand.u32 %v63, 4294901760
    %589 = vmatpush1.msra.mxu0 %v588
    %590 = vmatprep.subr.mxu0 0.0
    %591 = vmatpush1.msra.mxu0 0.0
    %592 = vmatprep.subr.mxu0 0.0
    %593 = vmatpush1.msra.mxu0 0.0
    %594 = vmatprep.subr.mxu0 0.0
    %595 = vmatpush1.msra.mxu0 0.0
    %596 = vmatprep.subr.mxu0 0.0
    %597 = vmatpush1.msra.mxu0 0.0
    %598 = vmatprep.subr.mxu0 0.0
    %599 = vmatpush1.msra.mxu0 0.0
    %600 = vmatprep.subr.mxu0 0.0
    %601 = vmatpush1.msra.mxu0 0.0
    %602 = vmatprep.subr.mxu0 0.0
    %603 = vmatpush1.msra.mxu0 0.0
    %604 = vmatprep.subr.mxu0 0.0
    %605 = vmatpush1.msra.mxu0 0.0
    %606 = vmatprep.subr.mxu0 0.0
    %607 = vmatpush1.msra.mxu0 0.0
    %608 = vmatprep.subr.mxu0 0.0
    %609 = vmatpush1.msra.mxu0 0.0
    %610 = vmatprep.subr.mxu0 0.0
    %611 = vmatpush1.msra.mxu0 0.0
    %612 = vmatprep.subr.mxu0 0.0
    %613 = vmatpush1.msra.mxu0 0.0
    %614 = vmatprep.subr.mxu0 0.0
    %615 = vmatpush1.msra.mxu0 0.0
    %616 = vmatprep.subr.mxu0 0.0
    %617 = vmatpush1.msra.mxu0 0.0
    %618 = vmatprep.subr.mxu0 0.0
    %619 = vmatpush1.msra.mxu0 0.0
    %620 = vmatprep.subr.mxu0 0.0
    %621 = vmatpush1.msra.mxu0 0.0
    %622 = vmatprep.subr.mxu0 0.0
    %623 = vmatpush1.msra.mxu0 0.0
    %624 = vmatprep.subr.mxu0 0.0
    %625 = vmatpush1.msra.mxu0 0.0
    %626 = vmatprep.subr.mxu0 0.0
    %627 = vmatpush1.msra.mxu0 0.0
    %628 = vmatprep.subr.mxu0 0.0
    %629 = vmatpush1.msra.mxu0 0.0
    %630 = vmatprep.subr.mxu0 0.0
    %631 = vmatpush1.msra.mxu0 0.0
    %632 = vmatprep.subr.mxu0 0.0
    %633 = vmatpush1.msra.mxu0 0.0
    %634 = vmatprep.subr.mxu0 0.0
    %635 = vmatpush1.msra.mxu0 0.0
    %636 = vmatprep.subr.mxu0 0.0
    %637 = vmatpush1.msra.mxu0 0.0
    %638 = vmatprep.mubr.f32.mxu0 0.0
    %v639 = vand.u32 %v66, 4294901760
    %640 = vmatmul.mubr.f32.gmra.mrb[0].mxu0 %v639
    %v641 = vpop.f32.mrb[0].mxu0
    %v642 = vadd.f32 %v557, %v641
    %v643 = vpop.f32.mrb[0].mxu0
    %644 = vmatprep.mubr.f32.mxu0 0.0
    %v645 = vand.u32 %v69, 4294901760
    %646 = vmatmul.mubr.f32.gmra.mrb[0].mxu0 %v645
    %v647 = vpop.f32.mrb[0].mxu0
    %v648 = vadd.f32 %v563, %v647
    %v649 = vpop.f32.mrb[0].mxu0
    %650 = vdwg.mxu0
    %651 = vst [vmem:[#allocation5] sm:$0xff] %v642
    %652 = vst [vmem:[#allocation5 + $0x8] sm:$0xff] %v648
    // Predicated region
    $region14: #{tpu_custom_call.1} parent=1 // pred_check
      _
    $region15: #{tpu_custom_call.1} parent=1 // pred_check_branch
      %654 = sbr.rel (0) target = $region17
    $region16: #{tpu_custom_call.1} parent=1 // pred_region
      %s656 = ssub.s32 256, 256
      %657 = vsyncadd [#allocation4], %s656
      %s658 = sshll.u32 [#allocation5], 4
      %s659 = int_to_ptr.vmem [resolvable:$true] %s658
      %664 = dma.vmem_to_hbm [thread:$0]  %s659, 256, %s2, [#allocation4], 128, 128, 8
    $region17: #{tpu_custom_call.1} parent=1 // pred_fallthru
      _
    // Predicated region
    $region18: #{tpu_custom_call.1} parent=1 // pred_check
      _
    $region19: #{tpu_custom_call.1} parent=1 // pred_check_branch
      %666 = sbr.rel (0) target = $region21
    $region20: #{tpu_custom_call.1} parent=1 // pred_region
      %667 = dma.done [#allocation4], 256
    $region21: #{tpu_custom_call.1} parent=1 // pred_fallthru
      _
    %668 = vsyncpa [#allocation3], 1
    %669 = vsyncpa [#allocation4], 1

</llo_original>
